<compile_context>
chip_gen: v7x
topology: tpu7x:2x2x1
jax: 0.10.0
libtpu: 0.0.40
codegen_flags: <defaults>
</compile_context>

<pallas_src>
import functools
import math

import jax
import jax.numpy as jnp
import numpy as np
from jax.experimental import pallas as pl
from jax.experimental.pallas import tpu as pltpu


def _rel_pos_bias_kernel(table_ref, out_ref, *, n, num_buckets, max_distance,
                         tq, rows_per_tile):
    q = pl.program_id(0)
    half = num_buckets // 2
    max_exact = half // 2

    # --- relative position (j - i) for this flat chunk of the (n, n) grid ---
    if (n & (n - 1)) == 0:
        # n is a power of two: stay fully flat, derive (i, j) with shift/mask.
        shift = n.bit_length() - 1
        idx = q * tq + jax.lax.broadcasted_iota(jnp.int32, (1, tq), 1)
        i = idx >> shift
        j = idx & (n - 1)
        rel = j - i                                              # (1, tq)
    else:
        # General n: tile covers whole rows; build 2-D indices then flatten.
        base_row = q * rows_per_tile
        ii = base_row + jax.lax.broadcasted_iota(
            jnp.int32, (rows_per_tile, n), 0)
        jj = jax.lax.broadcasted_iota(jnp.int32, (rows_per_tile, n), 1)
        rel = (jj - ii).reshape(1, tq)

    # --- bucket computation (matches PyTorch _relative_position_bucket) ---
    neg = -rel
    ret = jnp.where(neg < 0, half, 0).astype(jnp.int32)
    na = jnp.abs(neg)
    is_small = na < max_exact
    # Clamp before log so the (unused) small branch doesn't produce -inf.
    nf = jnp.maximum(na, max_exact).astype(jnp.float32)
    val_if_large = max_exact + (
        jnp.log(nf / max_exact)
        / math.log(max_distance / max_exact)
        * (half - max_exact)
    ).astype(jnp.int32)
    val_if_large = jnp.minimum(val_if_large, half - 1)
    bucket = ret + jnp.where(is_small, na, val_if_large)         # (1, tq) int32

    # --- embedding lookup via one-hot matmul on the MXU (exact in f32) ---
    b_iota = jax.lax.broadcasted_iota(jnp.int32, (num_buckets, tq), 0)
    one_hot = (b_iota == bucket).astype(jnp.float32)             # (buckets, tq)
    # (heads, num_buckets) @ (num_buckets, tq) -> (heads, tq), lane-dense store.
    out_ref[...] = jnp.einsum(
        "hb,bq->hq", table_ref[...], one_hot,
        preferred_element_type=jnp.float32,
    ).astype(out_ref.dtype)


def _pick_tile(n, cap):
    """Pick a lane-dense chunk width TQ of the flattened n*n axis."""
    total = n * n
    if total <= cap:
        return total, n                       # single block == full axis
    if (n & (n - 1)) == 0:
        return cap, max(1, cap // n)          # cap is a pow2 multiple of 128
    # General n: whole rows per tile, TQ must be a multiple of 128.
    best = None
    for r in range(1, n + 1):
        if n % r:
            continue
        tq = r * n
        if tq > cap:
            break
        if tq % 128 == 0:
            best = (tq, r)
    if best is None:
        return total, n                       # fall back to a single block
    return best


def relative_position_bias(table, n, *, num_buckets=32, max_distance=128,
                           tq_cap=8192):
    """table: (num_buckets, heads) float32 (nn.Embedding.weight layout).

    Returns the bias as (heads, n, n) float32, matching the PyTorch forward.
    """
    num_buckets_t, heads = table.shape
    assert num_buckets_t == num_buckets
    assert num_buckets >= 4, "num_buckets must be >= 4 (max_exact >= 1)"
    assert n >= 1

    total = n * n
    tq, rows_per_tile = _pick_tile(n, tq_cap)
    grid = (total // tq,)

    # Pre-transpose to (heads, num_buckets): MXU LHS without in-kernel XLU work.
    table_t = jnp.transpose(table, (1, 0))

    kernel = functools.partial(
        _rel_pos_bias_kernel,
        n=n, num_buckets=num_buckets, max_distance=max_distance,
        tq=tq, rows_per_tile=rows_per_tile,
    )

    out_flat = pl.pallas_call(
        kernel,
        out_shape=jax.ShapeDtypeStruct((heads, total), jnp.float32),
        grid_spec=pltpu.PrefetchScalarGridSpec(
            num_scalar_prefetch=0,
            grid=grid,
            in_specs=[
                # Tiny (heads, num_buckets) table stays resident every step.
                pl.BlockSpec((heads, num_buckets), lambda q: (0, 0)),
            ],
            out_specs=pl.BlockSpec((heads, tq), lambda q: (0, q)),
        ),
        compiler_params=pltpu.CompilerParams(
            dimension_semantics=("parallel",),      # megacore on v7x
            vmem_limit_bytes=32 * 1024 * 1024,
        ),
    )(table_t)

    # Free layout-only reshape in the wrapper (kernel store stays lane-dense).
    return out_flat.reshape(heads, n, n)


def _reference(table, n, *, num_buckets=32, max_distance=128):
    """Pure-JAX reference of the PyTorch forward, for verification."""
    q = jnp.arange(n)[:, None]
    k = jnp.arange(n)[None, :]
    rel = k - q
    neg = -rel
    half = num_buckets // 2
    ret = jnp.where(neg < 0, half, 0)
    na = jnp.abs(neg)
    max_exact = half // 2
    is_small = na < max_exact
    nf = jnp.maximum(na, max_exact).astype(jnp.float32)
    vil = max_exact + (
        jnp.log(nf / max_exact) / math.log(max_distance / max_exact)
        * (half - max_exact)
    ).astype(jnp.int32)
    vil = jnp.minimum(vil, half - 1)
    bucket = ret + jnp.where(is_small, na, vil)
    values = table[bucket]                   # (n, n, heads)
    return jnp.transpose(values, (2, 0, 1))  # (heads, n, n)


if __name__ == "__main__":
    heads = 8
    num_buckets = 32
    max_distance = 128
    n = 16

    # Deterministic "nn.Embedding(num_buckets, heads)" weight.
    key = jax.random.PRNGKey(0)
    table = jax.random.normal(key, (num_buckets, heads), dtype=jnp.float32)

    out = relative_position_bias(
        table, n, num_buckets=num_buckets, max_distance=max_distance
    )
    out = jax.block_until_ready(out)

    ref = _reference(table, n, num_buckets=num_buckets, max_distance=max_distance)
    np.testing.assert_allclose(np.asarray(out), np.asarray(ref),
                               rtol=1e-6, atol=1e-6)
    assert out.shape == (heads, n, n)

    print("KERNEL_OK")
</pallas_src>

<mosaic_0001>
module attributes {stable_mosaic.version = 11 : i64} {
  func.func @_rel_pos_bias_kernel(%arg0: i32, %arg1: memref<8x32xf32, #tpu.memory_space<vmem>>, %arg2: memref<8x256xf32, #tpu.memory_space<vmem>>) attributes {dimension_semantics = [#tpu.dimension_semantics<parallel>], iteration_bounds = array<i64: 1>, scalar_prefetch = 0 : i64, scratch_operands = 0 : i64, tpu.core_type = #tpu.core_type<tc>, window_params = [{pipeline_mode = #tpu.pipeline_mode<synchronous>, transform_indices = @transform_0, window_bounds = array<i64: 8, 32>}, {transform_indices = @transform_1, window_bounds = array<i64: 8, 256>}]} {
    %c256_i32 = arith.constant 256 : i32
    %0 = arith.muli %arg0, %c256_i32 : i32
    %1 = tpu.iota {dimensions = array<i32: 1>} : vector<1x256xi32>
    %2 = vector.broadcast %0 : i32 to vector<1x256xi32>
    %3 = arith.addi %2, %1 : vector<1x256xi32>
    %c4_i32 = arith.constant 4 : i32
    %4 = vector.broadcast %c4_i32 : i32 to vector<1x256xi32>
    %5 = arith.shrsi %3, %4 : vector<1x256xi32>
    %c15_i32 = arith.constant 15 : i32
    %6 = vector.broadcast %c15_i32 : i32 to vector<1x256xi32>
    %7 = arith.andi %3, %6 : vector<1x256xi32>
    %8 = arith.subi %7, %5 : vector<1x256xi32>
    %c0_i32 = arith.constant 0 : i32
    %9 = vector.broadcast %c0_i32 : i32 to vector<1x256xi32>
    %10 = arith.subi %9, %8 : vector<1x256xi32>
    %c0_i32_0 = arith.constant 0 : i32
    %11 = vector.broadcast %c0_i32_0 : i32 to vector<1x256xi32>
    %12 = arith.cmpi slt, %10, %11 : vector<1x256xi32>
    %c16_i32 = arith.constant 16 : i32
    %c0_i32_1 = arith.constant 0 : i32
    %13 = vector.broadcast %c16_i32 : i32 to vector<1x256xi32>
    %14 = vector.broadcast %c0_i32_1 : i32 to vector<1x256xi32>
    %15 = arith.select %12, %13, %14 : vector<1x256xi1>, vector<1x256xi32>
    %16 = math.absi %10 : vector<1x256xi32>
    %c8_i32 = arith.constant 8 : i32
    %17 = vector.broadcast %c8_i32 : i32 to vector<1x256xi32>
    %18 = arith.cmpi slt, %16, %17 : vector<1x256xi32>
    %c8_i32_2 = arith.constant 8 : i32
    %19 = vector.broadcast %c8_i32_2 : i32 to vector<1x256xi32>
    %20 = arith.maxsi %16, %19 : vector<1x256xi32>
    %21 = arith.sitofp %20 : vector<1x256xi32> to vector<1x256xf32>
    %cst = arith.constant 8.000000e+00 : f32
    %22 = vector.broadcast %cst : f32 to vector<1x256xf32>
    %23 = arith.divf %21, %22 : vector<1x256xf32>
    %24 = math.log %23 : vector<1x256xf32>
    %cst_3 = arith.constant 2.77258873 : f32
    %25 = vector.broadcast %cst_3 : f32 to vector<1x256xf32>
    %26 = arith.divf %24, %25 : vector<1x256xf32>
    %cst_4 = arith.constant 8.000000e+00 : f32
    %27 = vector.broadcast %cst_4 : f32 to vector<1x256xf32>
    %28 = arith.mulf %26, %27 : vector<1x256xf32>
    %29 = arith.fptosi %28 : vector<1x256xf32> to vector<1x256xi32>
    %c8_i32_5 = arith.constant 8 : i32
    %30 = vector.broadcast %c8_i32_5 : i32 to vector<1x256xi32>
    %31 = arith.addi %30, %29 : vector<1x256xi32>
    %c15_i32_6 = arith.constant 15 : i32
    %32 = vector.broadcast %c15_i32_6 : i32 to vector<1x256xi32>
    %33 = arith.minsi %31, %32 : vector<1x256xi32>
    %34 = arith.select %18, %16, %33 : vector<1x256xi1>, vector<1x256xi32>
    %35 = arith.addi %15, %34 : vector<1x256xi32>
    %36 = tpu.iota {dimensions = array<i32: 0>} : vector<32x256xi32>
    %37 = vector.broadcast %35 : vector<1x256xi32> to vector<32x256xi32>
    %38 = arith.cmpi eq, %36, %37 : vector<32x256xi32>
    %39 = arith.extui %38 : vector<32x256xi1> to vector<32x256xi32>
    %40 = arith.sitofp %39 : vector<32x256xi32> to vector<32x256xf32>
    %c0 = arith.constant 0 : index
    %c0_7 = arith.constant 0 : index
    %41 = vector.load %arg1[%c0, %c0_7] : memref<8x32xf32, #tpu.memory_space<vmem>>, vector<8x32xf32>
    "tpu.trace_start"() <{level = 10 : i32, message = "hb,bq->hq"}> : () -> ()
    %cst_8 = arith.constant dense<0.000000e+00> : vector<8x256xf32>
    %42 = tpu.matmul %41, %40, %cst_8 {dimension_numbers = #tpu.dot_dimension_numbers<[1], [0], [0], [1], [0, 0, 1, 1], [], []>} : vector<8x32xf32>, vector<32x256xf32>, vector<8x256xf32> -> vector<8x256xf32>
    "tpu.trace_stop"() : () -> ()
    %c0_9 = arith.constant 0 : index
    %c0_10 = arith.constant 0 : index
    %43 = vector.load %arg2[%c0_9, %c0_10] : memref<8x256xf32, #tpu.memory_space<vmem>>, vector<8x256xf32>
    tpu.vector_store %arg2[%c0_9, %c0_10], %42 {strides = array<i32>} : memref<8x256xf32, #tpu.memory_space<vmem>>, vector<8x256xf32>,
    return
  }
  func.func @transform_0(%arg0: i32) -> (i32, i32) {
    %c0_i32 = arith.constant 0 : i32
    %c0_i32_0 = arith.constant 0 : i32
    %c0_i32_1 = arith.constant 0 : i32
    return %c0_i32, %c0_i32_0 : i32, i32
  }
  func.func @transform_1(%arg0: i32) -> (i32, i32) {
    %c0_i32 = arith.constant 0 : i32
    %c0_i32_0 = arith.constant 0 : i32
    return %c0_i32, %arg0 : i32, i32
  }
}

</mosaic_0001>

<llo_original>
// kernel: tpu_custom_call.1
$region0: #{tpu_custom_call.1}
  #allocation0 [shape = 'u32[]', space=smem, size = 0x4, offset = 0x4, fixed_abs, tag = 'smem constant byte address 0x4 - core index']
  #allocation1 [shape = 'u32[144,128]{1,0:T(1,128)}', space=vmem, size = 0x12000, scoped, tag = 'internal scratch']
  %s0 = inlined_call_operand.hbm [shape: f32[8,32], index: 0, kind: input, shape index: {}]
  %s1 = inlined_call_operand.hbm [shape: f32[8,256], index: 1, kind: output, shape index: {}]
  %s2 = sld [smem:[#allocation0]]
  $region18: #{tpu_custom_call.1} parent=0
    _
  %s4 = ssub.s32 1, %s2
  %s5 = scalar_select 0, %s4, %s2
  $region1: #{tpu_custom_call.1} parent=0
    #allocation2 [shape = 'u8[4096]{0}', space=vmem, size = 0x1000, scoped, tag = 'input window, operand 0, single buffered']
    #allocation3 [shape = 's32[1]{0}', space=sflag, size = 0x4, scoped, tag = 'scoped memory for tpu_custom_call.1']
    #allocation4 [shape = 's32[1]{0}', space=sflag, size = 0x4, scoped, tag = 'scoped memory for tpu_custom_call.1']
    #allocation5 [shape = 'u8[8192]{0}', space=vmem, size = 0x2000, scoped, tag = 'output window, operand 0, single buffered']
    %6 = vsyncpa [#allocation3], 0
    %7 = vsyncpa [#allocation4], 0
    // Predicated region
    $region2: #{tpu_custom_call.1} parent=1 // pred_check
      _
    $region3: #{tpu_custom_call.1} parent=1 // pred_check_branch
      %9 = sbr.rel (0) target = $region5
    $region4: #{tpu_custom_call.1} parent=1 // pred_region
      %s11 = ssub.s32 128, 128
      %12 = vsyncadd [#allocation3], %s11
      %s14 = sshll.u32 [#allocation2], 4
      %s15 = int_to_ptr.vmem [resolvable:$true] %s14
      %17 = dma.hbm_to_vmem [thread:$0]  %s0, 128, %s15, [#allocation3]
    $region5: #{tpu_custom_call.1} parent=1 // pred_fallthru
      _
    // Predicated region
    $region6: #{tpu_custom_call.1} parent=1 // pred_check
      _
    $region7: #{tpu_custom_call.1} parent=1 // pred_check_branch
      %19 = sbr.rel (0) target = $region9
    $region8: #{tpu_custom_call.1} parent=1 // pred_region
      %20 = dma.done [#allocation3], 128
    $region9: #{tpu_custom_call.1} parent=1 // pred_fallthru
      _
    %s21 = smul.u32 0, 256
    %v22 = vlaneseq
    %v23 = vand.u32 %v22, 127
    %v24 = vadd.s32 %v23, 128
    %v25 = vstv %s21
    %v26 = vadd.s32 %v25, %v23
    %v27 = vadd.s32 %v25, %v24
    %v28 = vshra.s32 %v26, 4
    %v29 = vshra.s32 %v27, 4
    %v30 = vand.u32 %v26, 15
    %v31 = vand.u32 %v27, 15
    %v32 = vsub.s32 %v30, %v28
    %v33 = vsub.s32 %v31, %v29
    %v34 = vsub.s32 0, %v32
    %v35 = vsub.s32 0, %v33
    %vm36 = vcmp.lt.s32.totalorder %v34, 0
    %vm37 = vcmp.lt.s32.totalorder %v35, 0
    %v38 = vsel %vm36, 16, 0
    %v39 = vsel %vm37, 16, 0
    %v40 = vsub.s32 0, %v34
    %v41 = vsel %vm36, %v40, %v34
    %v42 = vsub.s32 0, %v35
    %v43 = vsel %vm37, %v42, %v35
    %vm44 = vcmp.lt.s32.totalorder %v41, 8
    %vm45 = vcmp.lt.s32.totalorder %v43, 8
    %vm46 = vcmp.gt.s32.totalorder %v41, 8
    %v47 = vsel %vm46, %v41, 8
    %vm48 = vcmp.gt.s32.totalorder %v43, 8
    %v49 = vsel %vm48, %v43, 8
    %v50 = vcvt.s32.f32 %v47
    %v51 = vcvt.s32.f32 %v49
    %v52 = vrcp.pop 8.0
    %v53 = vmul.f32 %v50, %v52
    %v54 = vmul.f32 %v51, %v52
    %v55 = vlog2.pop %v53
    %v56 = vmul.f32 %v55, 0.6931472
    %v57 = vlog2.pop %v54
    %v58 = vmul.f32 %v57, 0.6931472
    %v59 = vrcp.pop 2.7725887
    %v60 = vmul.f32 %v56, %v59
    %v61 = vmul.f32 %v58, %v59
    %v62 = vmul.f32 %v60, 8.0
    %v63 = vmul.f32 %v61, 8.0
    %v64 = vcvt.f32.s32.to.zero.pseudo %v62
    %v65 = vcvt.f32.s32.to.zero.pseudo %v63
    %v66 = vadd.s32 %v64, 8
    %v67 = vadd.s32 %v65, 8
    %vm68 = vcmp.lt.s32.totalorder %v66, 15
    %v69 = vsel %vm68, %v66, 15
    %vm70 = vcmp.lt.s32.totalorder %v67, 15
    %v71 = vsel %vm70, %v67, 15
    %v72 = vsel %vm44, %v41, %v69
    %v73 = vsel %vm45, %v43, %v71
    %v74 = vadd.s32 %v38, %v72
    %v75 = vadd.s32 %v39, %v73
    %v76 = vlaneseq
    %v77 = vshrl.u32 %v76, 7
    %v78 = vadd.s32 %v77, 8
    %v79 = vadd.s32 %v77, 16
    %v80 = vadd.s32 %v77, 24
    %vm81 = vcmp.eq.s32.totalorder %v77, %v74
    %vm82 = vcmp.eq.s32.totalorder %v77, %v75
    %vm83 = vcmp.eq.s32.totalorder %v78, %v74
    %vm84 = vcmp.eq.s32.totalorder %v78, %v75
    %vm85 = vcmp.eq.s32.totalorder %v79, %v74
    %vm86 = vcmp.eq.s32.totalorder %v79, %v75
    %vm87 = vcmp.eq.s32.totalorder %v80, %v74
    %vm88 = vcmp.eq.s32.totalorder %v80, %v75
    %v89 = vsel %vm81, 1, 0
    %v90 = vsel %vm82, 1, 0
    %v91 = vsel %vm83, 1, 0
    %v92 = vsel %vm84, 1, 0
    %v93 = vsel %vm85, 1, 0
    %v94 = vsel %vm86, 1, 0
    %v95 = vsel %vm87, 1, 0
    %v96 = vsel %vm88, 1, 0
    %v97 = vcvt.s32.f32 %v89
    %v98 = vcvt.s32.f32 %v90
    %v99 = vcvt.s32.f32 %v91
    %v100 = vcvt.s32.f32 %v92
    %v101 = vcvt.s32.f32 %v93
    %v102 = vcvt.s32.f32 %v94
    %v103 = vcvt.s32.f32 %v95
    %v104 = vcvt.s32.f32 %v96
    %v105 = vld [vmem:[#allocation2] sm:$0xff]
    %vm106 = vcmask 261120
    %v108 = vsel %vm106, %v105, 0
    %110 = vmatprep.subr.mxu0 %v98
    %111 = vmatpush1.msra.mxu0 %v97
    %112 = vmatprep.subr.mxu0 %v100
    %113 = vmatpush1.msra.mxu0 %v99
    %114 = vmatprep.subr.mxu0 %v102
    %115 = vmatpush1.msra.mxu0 %v101
    %116 = vmatprep.subr.mxu0 %v104
    %117 = vmatpush1.msra.mxu0 %v103
    %118 = vmatprep.subr.mxu0 0.0
    %119 = vmatpush1.msra.mxu0 0.0
    %120 = vmatprep.subr.mxu0 0.0
    %121 = vmatpush1.msra.mxu0 0.0
    %122 = vmatprep.subr.mxu0 0.0
    %123 = vmatpush1.msra.mxu0 0.0
    %124 = vmatprep.subr.mxu0 0.0
    %125 = vmatpush1.msra.mxu0 0.0
    %126 = vmatprep.subr.mxu0 0.0
    %127 = vmatpush1.msra.mxu0 0.0
    %128 = vmatprep.subr.mxu0 0.0
    %129 = vmatpush1.msra.mxu0 0.0
    %130 = vmatprep.subr.mxu0 0.0
    %131 = vmatpush1.msra.mxu0 0.0
    %132 = vmatprep.subr.mxu0 0.0
    %133 = vmatpush1.msra.mxu0 0.0
    %134 = vmatprep.subr.mxu0 0.0
    %135 = vmatpush1.msra.mxu0 0.0
    %136 = vmatprep.subr.mxu0 0.0
    %137 = vmatpush1.msra.mxu0 0.0
    %138 = vmatprep.subr.mxu0 0.0
    %139 = vmatpush1.msra.mxu0 0.0
    %140 = vmatprep.subr.mxu0 0.0
    %141 = vmatpush1.msra.mxu0 0.0
    %142 = vmatprep.subr.mxu0 0.0
    %143 = vmatpush1.msra.mxu0 0.0
    %144 = vmatprep.subr.mxu0 0.0
    %145 = vmatpush1.msra.mxu0 0.0
    %146 = vmatprep.subr.mxu0 0.0
    %147 = vmatpush1.msra.mxu0 0.0
    %148 = vmatprep.subr.mxu0 0.0
    %149 = vmatpush1.msra.mxu0 0.0
    %150 = vmatprep.subr.mxu0 0.0
    %151 = vmatpush1.msra.mxu0 0.0
    %152 = vmatprep.subr.mxu0 0.0
    %153 = vmatpush1.msra.mxu0 0.0
    %154 = vmatprep.subr.mxu0 0.0
    %155 = vmatpush1.msra.mxu0 0.0
    %156 = vmatprep.subr.mxu0 0.0
    %157 = vmatpush1.msra.mxu0 0.0
    %158 = vmatprep.subr.mxu0 0.0
    %159 = vmatpush1.msra.mxu0 0.0
    %160 = vmatprep.subr.mxu0 0.0
    %161 = vmatpush1.msra.mxu0 0.0
    %162 = vmatprep.subr.mxu0 0.0
    %163 = vmatpush1.msra.mxu0 0.0
    %164 = vmatprep.subr.mxu0 0.0
    %165 = vmatpush1.msra.mxu0 0.0
    %166 = vmatprep.subr.mxu0 0.0
    %167 = vmatpush1.msra.mxu0 0.0
    %168 = vmatprep.subr.mxu0 0.0
    %169 = vmatpush1.msra.mxu0 0.0
    %170 = vmatprep.subr.mxu0 0.0
    %171 = vmatpush1.msra.mxu0 0.0
    %172 = vmatprep.subr.mxu0 0.0
    %173 = vmatpush1.msra.mxu0 0.0
    %174 = vmatprep.mubr.f32.mxu0 0.0
    %175 = vmatmul.mubr.f32.gmra.mrb[0].mxu0 %v108
    %v176 = vpop.f32.mrb[0].mxu0
    %v177 = vadd.f32 0.0, %v176
    %v178 = vpop.f32.mrb[0].mxu0
    %v179 = vadd.f32 0.0, %v178
    %180 = vdwg.mxu0
    %181 = vst [vmem:[#allocation5] sm:$0xff] %v177
    %182 = vst [vmem:[#allocation5 + $0x8] sm:$0xff] %v179
    // Predicated region
    $region10: #{tpu_custom_call.1} parent=1 // pred_check
      _
    $region11: #{tpu_custom_call.1} parent=1 // pred_check_branch
      %184 = sbr.rel (0) target = $region13
    $region12: #{tpu_custom_call.1} parent=1 // pred_region
      %s186 = ssub.s32 256, 256
      %187 = vsyncadd [#allocation4], %s186
      %s189 = sshll.u32 [#allocation5], 4
      %s190 = int_to_ptr.vmem [resolvable:$true] %s189
      %192 = dma.vmem_to_hbm [thread:$0]  %s190, 256, %s1, [#allocation4]
    $region13: #{tpu_custom_call.1} parent=1 // pred_fallthru
      _
    // Predicated region
    $region14: #{tpu_custom_call.1} parent=1 // pred_check
      _
    $region15: #{tpu_custom_call.1} parent=1 // pred_check_branch
      %194 = sbr.rel (0) target = $region17
    $region16: #{tpu_custom_call.1} parent=1 // pred_region
      %195 = dma.done [#allocation4], 256
    $region17: #{tpu_custom_call.1} parent=1 // pred_fallthru
      _
    %196 = vsyncpa [#allocation3], 1
    %197 = vsyncpa [#allocation4], 1

</llo_original>
